<compile_context>
chip_gen: v7x
topology: tpu7x:2x2x1
jax: 0.10.0
libtpu: 0.0.40
codegen_flags: <defaults>
</compile_context>

<pallas_src>
import jax
import jax.numpy as jnp
from jax.experimental import pallas as pl
from jax.experimental.pallas import tpu as pltpu


def _scale_mul_kernel(s_ref, x_ref, o_ref):
    # s_ref: (bc, 1) per-channel scale; x_ref/o_ref: (bc, HW) feature slab.
    # Broadcast across the lane (spatial) axis; pure VPU elementwise multiply.
    o_ref[...] = x_ref[...] * s_ref[...]


def broadcast_mul(x428, x423):
    """x428: (N, C, 1, 1), x423: (N, C, H, W) -> (N, C, H, W)."""
    n, c, h, w = x423.shape
    assert x428.shape == (n, c, 1, 1)
    hw = h * w
    c_total = n * c  # per-(batch, channel) scale -> fold N into the channel axis

    # Native layout (no transposes): channels on sublanes, spatial on lanes.
    x2d = x423.reshape(c_total, hw)
    s2d = x428.reshape(c_total, 1)

    # Grid selection: the whole problem fits in VMEM everywhere, so default to
    # a single full-extent block.  When the channel axis splits into 2 equal,
    # non-ragged sublane blocks (multiple of 8), use grid=(2,) marked
    # "parallel" so v7x can shard the two blocks across its 2 TensorCores
    # (neutral on single-TC v5e/v6e: one extra ~0.35 µs grid step).
    if c_total >= 512 and c_total % 16 == 0:
        nb = 2
    else:
        nb = 1
    bc = c_total // nb

    itemsize = jnp.dtype(x423.dtype).itemsize
    cost = pl.CostEstimate(
        flops=c_total * hw,
        transcendentals=0,
        bytes_accessed=(2 * c_total * hw + c_total) * itemsize,
    )

    out2d = pl.pallas_call(
        _scale_mul_kernel,
        out_shape=jax.ShapeDtypeStruct((c_total, hw), x423.dtype),
        grid=(nb,),
        in_specs=[
            pl.BlockSpec((bc, 1), lambda i: (i, 0)),    # per-channel scale
            pl.BlockSpec((bc, hw), lambda i: (i, 0)),   # feature-map slab
        ],
        out_specs=pl.BlockSpec((bc, hw), lambda i: (i, 0)),
        compiler_params=pltpu.CompilerParams(
            dimension_semantics=("parallel",),
        ),
        cost_estimate=cost,
    )(s2d, x2d)

    return out2d.reshape(n, c, h, w)


if __name__ == "__main__":
    key = jax.random.PRNGKey(0)
    k1, k2 = jax.random.split(key)

    # Shapes implied by the module's forward (already small: ~80K elements).
    C, H, W = 1632, 7, 7
    x423 = jax.random.normal(k1, (1, C, H, W), dtype=jnp.float32)
    x428 = jax.random.normal(k2, (1, C, 1, 1), dtype=jnp.float32)

    out = broadcast_mul(x428, x423)
    jax.block_until_ready(out)

    # Sanity check against plain JAX broadcasting semantics (== PyTorch mul).
    ref = x428 * x423
    assert out.shape == ref.shape
    assert jnp.allclose(out, ref, atol=1e-6, rtol=1e-6)

    print("KERNEL_OK")
</pallas_src>

<mosaic_0001>
module attributes {stable_mosaic.version = 11 : i64} {
  func.func @_scale_mul_kernel(%arg0: i32, %arg1: memref<816x1xf32, #tpu.memory_space<vmem>>, %arg2: memref<816x49xf32, #tpu.memory_space<vmem>>, %arg3: memref<816x49xf32, #tpu.memory_space<vmem>>) attributes {dimension_semantics = [#tpu.dimension_semantics<parallel>], iteration_bounds = array<i64: 2>, scalar_prefetch = 0 : i64, scratch_operands = 0 : i64, tpu.core_type = #tpu.core_type<tc>, window_params = [{transform_indices = @transform_0, window_bounds = array<i64: 816, 1>}, {transform_indices = @transform_1, window_bounds = array<i64: 816, 49>}, {transform_indices = @transform_2, window_bounds = array<i64: 816, 49>}]} {
    %c0 = arith.constant 0 : index
    %c0_0 = arith.constant 0 : index
    %0 = vector.load %arg2[%c0, %c0_0] : memref<816x49xf32, #tpu.memory_space<vmem>>, vector<816x49xf32>
    %c0_1 = arith.constant 0 : index
    %c0_2 = arith.constant 0 : index
    %1 = vector.load %arg1[%c0_1, %c0_2] : memref<816x1xf32, #tpu.memory_space<vmem>>, vector<816x1xf32>
    %2 = vector.broadcast %1 : vector<816x1xf32> to vector<816x49xf32>
    %3 = arith.mulf %0, %2 : vector<816x49xf32>
    %c0_3 = arith.constant 0 : index
    %c0_4 = arith.constant 0 : index
    %4 = vector.load %arg3[%c0_3, %c0_4] : memref<816x49xf32, #tpu.memory_space<vmem>>, vector<816x49xf32>
    tpu.vector_store %arg3[%c0_3, %c0_4], %3 {strides = array<i32>} : memref<816x49xf32, #tpu.memory_space<vmem>>, vector<816x49xf32>,
    return
  }
  func.func @transform_0(%arg0: i32) -> (i32, i32) {
    %c0_i32 = arith.constant 0 : i32
    %c0_i32_0 = arith.constant 0 : i32
    return %arg0, %c0_i32 : i32, i32
  }
  func.func @transform_1(%arg0: i32) -> (i32, i32) {
    %c0_i32 = arith.constant 0 : i32
    %c0_i32_0 = arith.constant 0 : i32
    return %arg0, %c0_i32 : i32, i32
  }
  func.func @transform_2(%arg0: i32) -> (i32, i32) {
    %c0_i32 = arith.constant 0 : i32
    %c0_i32_0 = arith.constant 0 : i32
    return %arg0, %c0_i32 : i32, i32
  }
}

</mosaic_0001>

<llo_original>
// kernel: tpu_custom_call.1
$region0: #{tpu_custom_call.1}
  #allocation0 [shape = 'u32[]', space=smem, size = 0x4, offset = 0x4, fixed_abs, tag = 'smem constant byte address 0x4 - core index']
  #allocation1 [shape = 'u32[144,128]{1,0:T(1,128)}', space=vmem, size = 0x12000, scoped, tag = 'internal scratch']
  %s0 = inlined_call_operand.vmem [shape: f32[1632,1], index: 0, kind: input, shape index: {}]
  %s1 = inlined_call_operand.vmem [shape: f32[1632,49], index: 1, kind: input, shape index: {}]
  %s2 = inlined_call_operand.vmem [shape: f32[1632,49], index: 2, kind: output, shape index: {}]
  %s3 = sld [smem:[#allocation0]]
  $region41: #{tpu_custom_call.1} parent=0
    _
  %s5 = ssub.s32 1, %s3
  %s6 = scalar_select 0, %s5, %s3
  loop: start=0, step=1, limit=4
  $region2: #{tpu_custom_call.1} parent=0 // loop_pre_header
    _
  $region3: #{tpu_custom_call.1} parent=0 // loop_header
    %s8 = sphi 0, %s12
    %p9 = scmp.ge.s32.totalorder %s8, 4
    %s18 = sphi 0, %s20
    %s21 = sphi 0, %s18
    %s22 = sphi 0, %s21
    %s38 = sphi 0, %s22
    %s44 = sphi 0, %s46
    %s47 = sphi 0, %s44
    %s48 = sphi 0, %s47
    %s64 = sphi 0, %s48
    %s70 = sphi 0, %s72
    %s73 = sphi 0, %s70
    %s74 = sphi 0, %s73
    %s90 = sphi 0, %s74
  $region4: #{tpu_custom_call.1} parent=0 // loop_header_branch
    %11 = sbr.rel (%p9) target = $region8
  $region5: #{tpu_custom_call.1} parent=0 // loop_body
    %s13 = ssub.s32 %s8, 1
    %s14 = ssub.s32 %s8, 2
    %s15 = sadd.s32 %s8, 1
    %s16 = ssub.s32 %s8, %s15
    %p17 = scmp.eq.s32.totalorder %s16, 0
    %s19 = sadd.s32 %s18, 1
    %s20 = scalar_select %p17, %s18, %s19
    %p23 = pneg %p17
    %p24 = scmp.eq.s32.totalorder %s8, 1
    %p25 = por %p23, %p24
    %p26 = scmp.ne.s32.totalorder %s18, %s21
    %p27 = scmp.eq.s32.totalorder %s8, 0
    %p28 = por %p26, %p27
    %p29 = scmp.ne.s32.totalorder %s18, %s21
    %p30 = scmp.eq.s32.totalorder %s13, 1
    %p31 = por %p29, %p30
    %p32 = scmp.ne.s32.totalorder %s21, %s22
    %p33 = scmp.eq.s32.totalorder %s13, 0
    %p34 = por %p32, %p33
    %p35 = scmp.ne.s32.totalorder %s21, %s22
    %p36 = scmp.eq.s32.totalorder %s14, 1
    %p37 = por %p35, %p36
    %p39 = scmp.ne.s32.totalorder %s22, %s38
    %p40 = scmp.eq.s32.totalorder %s14, 0
    %p41 = por %p39, %p40
    %s42 = ssub.s32 %s8, %s15
    %p43 = scmp.eq.s32.totalorder %s42, 0
    %s45 = sadd.s32 %s44, 1
    %s46 = scalar_select %p43, %s44, %s45
    %p49 = pneg %p43
    %p50 = scmp.eq.s32.totalorder %s8, 1
    %p51 = por %p49, %p50
    %p52 = scmp.ne.s32.totalorder %s44, %s47
    %p53 = scmp.eq.s32.totalorder %s8, 0
    %p54 = por %p52, %p53
    %p55 = scmp.ne.s32.totalorder %s44, %s47
    %p56 = scmp.eq.s32.totalorder %s13, 1
    %p57 = por %p55, %p56
    %p58 = scmp.ne.s32.totalorder %s47, %s48
    %p59 = scmp.eq.s32.totalorder %s13, 0
    %p60 = por %p58, %p59
    %p61 = scmp.ne.s32.totalorder %s47, %s48
    %p62 = scmp.eq.s32.totalorder %s14, 1
    %p63 = por %p61, %p62
    %p65 = scmp.ne.s32.totalorder %s48, %s64
    %p66 = scmp.eq.s32.totalorder %s14, 0
    %p67 = por %p65, %p66
    %s68 = ssub.s32 %s8, %s15
    %p69 = scmp.eq.s32.totalorder %s68, 0
    %s71 = sadd.s32 %s70, 1
    %s72 = scalar_select %p69, %s70, %s71
    %p75 = pneg %p69
    %p76 = scmp.eq.s32.totalorder %s8, 1
    %p77 = por %p75, %p76
    %p78 = scmp.ne.s32.totalorder %s70, %s73
    %p79 = scmp.eq.s32.totalorder %s8, 0
    %p80 = por %p78, %p79
    %p81 = scmp.ne.s32.totalorder %s70, %s73
    %p82 = scmp.eq.s32.totalorder %s13, 1
    %p83 = por %p81, %p82
    %p84 = scmp.ne.s32.totalorder %s73, %s74
    %p85 = scmp.eq.s32.totalorder %s13, 0
    %p86 = por %p84, %p85
    %p87 = scmp.ne.s32.totalorder %s73, %s74
    %p88 = scmp.eq.s32.totalorder %s14, 1
    %p89 = por %p87, %p88
    %p91 = scmp.ne.s32.totalorder %s74, %s90
    %p92 = scmp.eq.s32.totalorder %s14, 0
    %p93 = por %p91, %p92
    %p94 = scmp.le.s32.totalorder 1, %s8
    %p95 = scmp.lt.s32.totalorder %s8, 3
    %p96 = pnand %p94, %p95
    %p97 = pneg %p96
    // Predicated region
    $region9: #{tpu_custom_call.1} parent=5 // pred_check
      _
    $region10: #{tpu_custom_call.1} parent=5 // pred_check_branch
      %99 = sbr.rel (%p96) target = $region12
    $region11: #{tpu_custom_call.1} parent=5 // pred_region
      %s100 = ssub.s32 %s8, 1
    $region12: #{tpu_custom_call.1} parent=5 // pred_fallthru
      _
    %p101 = scmp.lt.s32.totalorder %s8, 2
    // Predicated region
    $region13: #{tpu_custom_call.1} parent=5 // pred_check
      %p102 = pneg %p101
    $region14: #{tpu_custom_call.1} parent=5 // pred_check_branch
      %104 = sbr.rel (%p102) target = $region16
    $region15: #{tpu_custom_call.1} parent=5 // pred_region
      // Predicated region
      $region17: #{tpu_custom_call.1} parent=15 // pred_check
        %p105 = pneg %p28
      $region18: #{tpu_custom_call.1} parent=15 // pred_check_branch
        %107 = sbr.rel (%p105) target = $region20
      $region19: #{tpu_custom_call.1} parent=15 // pred_region
        %s108 = smul.u32 102, %s8
        %p109 = scmp.lt.s32.totalorder %s108, 203
        %s110 = scalar_select %p109, %s108, 203
        %s111 = smul.addr %s110, 8
        %s112 = scalar_lea.vmem %s0, %s111
        %s113 = smul.u32 102, %s8
      $region20: #{tpu_custom_call.1} parent=15 // pred_fallthru
        _
      // Predicated region
      $region21: #{tpu_custom_call.1} parent=15 // pred_check
        %p114 = pneg %p54
      $region22: #{tpu_custom_call.1} parent=15 // pred_check_branch
        %116 = sbr.rel (%p114) target = $region24
      $region23: #{tpu_custom_call.1} parent=15 // pred_region
        %s117 = smul.u32 102, %s8
        %p118 = scmp.lt.s32.totalorder %s117, 203
        %s119 = scalar_select %p118, %s117, 203
        %s120 = smul.addr %s119, 8
        %s121 = scalar_lea.vmem %s1, %s120
        %s122 = smul.u32 102, %s8
      $region24: #{tpu_custom_call.1} parent=15 // pred_fallthru
        _
    $region16: #{tpu_custom_call.1} parent=5 // pred_fallthru
      _
    %p123 = scmp.le.s32.totalorder 1, %s8
    %p124 = scmp.lt.s32.totalorder %s8, 3
    %p125 = pnand %p123, %p124
    %p126 = pneg %p125
    // Predicated region
    $region25: #{tpu_custom_call.1} parent=5 // pred_check
      _
    $region26: #{tpu_custom_call.1} parent=5 // pred_check_branch
      %128 = sbr.rel (%p125) target = $region28
    $region27: #{tpu_custom_call.1} parent=5 // pred_region
      %s129 = ssub.s32 %s8, 1
      %s130 = smul.u32 102, %s13
      %p131 = scmp.lt.s32.totalorder %s130, 203
      %s132 = scalar_select %p131, %s130, 203
      %s133 = smul.addr %s132, 8
      %s134 = scalar_lea.vmem %s0, %s133
      %p135 = pneg %p34
      %p136 = pneg %p31
      %s137 = smul.u32 102, %s13
      %p138 = scmp.lt.s32.totalorder %s137, 203
      %s139 = scalar_select %p138, %s137, 203
      %s140 = smul.addr %s139, 8
      %s141 = scalar_lea.vmem %s1, %s140
      %p142 = pneg %p60
      %p143 = pneg %p57
      %p144 = pneg %p86
      %p145 = pneg %p83
      %s146 = smul.u32 102, %s13
      %p147 = scmp.lt.s32.totalorder %s146, 203
      %s148 = scalar_select %p147, %s146, 203
      %s149 = smul.addr %s148, 8
      %s150 = scalar_lea.vmem %s2, %s149
      %s151 = smul.u32 102, %s13
      %p152 = scmp.lt.s32.totalorder %s151, 203
      %s153 = scalar_select %p152, %s151, 203
      %s154 = smul.addr %s153, 8
      %s155 = scalar_lea.vmem %s0, %s154
      %s156 = smul.u32 102, %s13
      %s157 = smul.u32 102, %s13
      %p158 = scmp.lt.s32.totalorder %s157, 203
      %s159 = scalar_select %p158, %s157, 203
      %s160 = smul.addr %s159, 8
      %s161 = scalar_lea.vmem %s1, %s160
      %s162 = smul.u32 102, %s13
      %s163 = smul.u32 102, %s13
      %p164 = scmp.lt.s32.totalorder %s163, 203
      %s165 = scalar_select %p164, %s163, 203
      %s166 = smul.addr %s165, 8
      %s167 = scalar_lea.vmem %s2, %s166
      %s168 = smul.u32 102, %s13
      %v169 = vld [vmem:[%s161] sm:$0xff]
      %v170 = vld [vmem:[%s161 + $0x8] sm:$0xff]
      %v171 = vld [vmem:[%s161 + $0x10] sm:$0xff]
      %v172 = vld [vmem:[%s161 + $0x18] sm:$0xff]
      %v173 = vld [vmem:[%s161 + $0x20] sm:$0xff]
      %v174 = vld [vmem:[%s161 + $0x28] sm:$0xff]
      %v175 = vld [vmem:[%s161 + $0x30] sm:$0xff]
      %v176 = vld [vmem:[%s161 + $0x38] sm:$0xff]
      %v177 = vld [vmem:[%s161 + $0x40] sm:$0xff]
      %v178 = vld [vmem:[%s161 + $0x48] sm:$0xff]
      %v179 = vld [vmem:[%s161 + $0x50] sm:$0xff]
      %v180 = vld [vmem:[%s161 + $0x58] sm:$0xff]
      %v181 = vld [vmem:[%s161 + $0x60] sm:$0xff]
      %v182 = vld [vmem:[%s161 + $0x68] sm:$0xff]
      %v183 = vld [vmem:[%s161 + $0x70] sm:$0xff]
      %v184 = vld [vmem:[%s161 + $0x78] sm:$0xff]
      %v185 = vld [vmem:[%s161 + $0x80] sm:$0xff]
      %v186 = vld [vmem:[%s161 + $0x88] sm:$0xff]
      %v187 = vld [vmem:[%s161 + $0x90] sm:$0xff]
      %v188 = vld [vmem:[%s161 + $0x98] sm:$0xff]
      %v189 = vld [vmem:[%s161 + $0xa0] sm:$0xff]
      %v190 = vld [vmem:[%s161 + $0xa8] sm:$0xff]
      %v191 = vld [vmem:[%s161 + $0xb0] sm:$0xff]
      %v192 = vld [vmem:[%s161 + $0xb8] sm:$0xff]
      %v193 = vld [vmem:[%s161 + $0xc0] sm:$0xff]
      %v194 = vld [vmem:[%s161 + $0xc8] sm:$0xff]
      %v195 = vld [vmem:[%s161 + $0xd0] sm:$0xff]
      %v196 = vld [vmem:[%s161 + $0xd8] sm:$0xff]
      %v197 = vld [vmem:[%s161 + $0xe0] sm:$0xff]
      %v198 = vld [vmem:[%s161 + $0xe8] sm:$0xff]
      %v199 = vld [vmem:[%s161 + $0xf0] sm:$0xff]
      %v200 = vld [vmem:[%s161 + $0xf8] sm:$0xff]
      %v201 = vld [vmem:[%s161 + $0x100] sm:$0xff]
      %v202 = vld [vmem:[%s161 + $0x108] sm:$0xff]
      %v203 = vld [vmem:[%s161 + $0x110] sm:$0xff]
      %v204 = vld [vmem:[%s161 + $0x118] sm:$0xff]
      %v205 = vld [vmem:[%s161 + $0x120] sm:$0xff]
      %v206 = vld [vmem:[%s161 + $0x128] sm:$0xff]
      %v207 = vld [vmem:[%s161 + $0x130] sm:$0xff]
      %v208 = vld [vmem:[%s161 + $0x138] sm:$0xff]
      %v209 = vld [vmem:[%s161 + $0x140] sm:$0xff]
      %v210 = vld [vmem:[%s161 + $0x148] sm:$0xff]
      %v211 = vld [vmem:[%s161 + $0x150] sm:$0xff]
      %v212 = vld [vmem:[%s161 + $0x158] sm:$0xff]
      %v213 = vld [vmem:[%s161 + $0x160] sm:$0xff]
      %v214 = vld [vmem:[%s161 + $0x168] sm:$0xff]
      %v215 = vld [vmem:[%s161 + $0x170] sm:$0xff]
      %v216 = vld [vmem:[%s161 + $0x178] sm:$0xff]
      %v217 = vld [vmem:[%s161 + $0x180] sm:$0xff]
      %v218 = vld [vmem:[%s161 + $0x188] sm:$0xff]
      %v219 = vld [vmem:[%s161 + $0x190] sm:$0xff]
      %v220 = vld [vmem:[%s161 + $0x198] sm:$0xff]
      %v221 = vld [vmem:[%s161 + $0x1a0] sm:$0xff]
      %v222 = vld [vmem:[%s161 + $0x1a8] sm:$0xff]
      %v223 = vld [vmem:[%s161 + $0x1b0] sm:$0xff]
      %v224 = vld [vmem:[%s161 + $0x1b8] sm:$0xff]
      %v225 = vld [vmem:[%s161 + $0x1c0] sm:$0xff]
      %v226 = vld [vmem:[%s161 + $0x1c8] sm:$0xff]
      %v227 = vld [vmem:[%s161 + $0x1d0] sm:$0xff]
      %v228 = vld [vmem:[%s161 + $0x1d8] sm:$0xff]
      %v229 = vld [vmem:[%s161 + $0x1e0] sm:$0xff]
      %v230 = vld [vmem:[%s161 + $0x1e8] sm:$0xff]
      %v231 = vld [vmem:[%s161 + $0x1f0] sm:$0xff]
      %v232 = vld [vmem:[%s161 + $0x1f8] sm:$0xff]
      %v233 = vld [vmem:[%s161 + $0x200] sm:$0xff]
      %v234 = vld [vmem:[%s161 + $0x208] sm:$0xff]
      %v235 = vld [vmem:[%s161 + $0x210] sm:$0xff]
      %v236 = vld [vmem:[%s161 + $0x218] sm:$0xff]
      %v237 = vld [vmem:[%s161 + $0x220] sm:$0xff]
      %v238 = vld [vmem:[%s161 + $0x228] sm:$0xff]
      %v239 = vld [vmem:[%s161 + $0x230] sm:$0xff]
      %v240 = vld [vmem:[%s161 + $0x238] sm:$0xff]
      %v241 = vld [vmem:[%s161 + $0x240] sm:$0xff]
      %v242 = vld [vmem:[%s161 + $0x248] sm:$0xff]
      %v243 = vld [vmem:[%s161 + $0x250] sm:$0xff]
      %v244 = vld [vmem:[%s161 + $0x258] sm:$0xff]
      %v245 = vld [vmem:[%s161 + $0x260] sm:$0xff]
      %v246 = vld [vmem:[%s161 + $0x268] sm:$0xff]
      %v247 = vld [vmem:[%s161 + $0x270] sm:$0xff]
      %v248 = vld [vmem:[%s161 + $0x278] sm:$0xff]
      %v249 = vld [vmem:[%s161 + $0x280] sm:$0xff]
      %v250 = vld [vmem:[%s161 + $0x288] sm:$0xff]
      %v251 = vld [vmem:[%s161 + $0x290] sm:$0xff]
      %v252 = vld [vmem:[%s161 + $0x298] sm:$0xff]
      %v253 = vld [vmem:[%s161 + $0x2a0] sm:$0xff]
      %v254 = vld [vmem:[%s161 + $0x2a8] sm:$0xff]
      %v255 = vld [vmem:[%s161 + $0x2b0] sm:$0xff]
      %v256 = vld [vmem:[%s161 + $0x2b8] sm:$0xff]
      %v257 = vld [vmem:[%s161 + $0x2c0] sm:$0xff]
      %v258 = vld [vmem:[%s161 + $0x2c8] sm:$0xff]
      %v259 = vld [vmem:[%s161 + $0x2d0] sm:$0xff]
      %v260 = vld [vmem:[%s161 + $0x2d8] sm:$0xff]
      %v261 = vld [vmem:[%s161 + $0x2e0] sm:$0xff]
      %v262 = vld [vmem:[%s161 + $0x2e8] sm:$0xff]
      %v263 = vld [vmem:[%s161 + $0x2f0] sm:$0xff]
      %v264 = vld [vmem:[%s161 + $0x2f8] sm:$0xff]
      %v265 = vld [vmem:[%s161 + $0x300] sm:$0xff]
      %v266 = vld [vmem:[%s161 + $0x308] sm:$0xff]
      %v267 = vld [vmem:[%s161 + $0x310] sm:$0xff]
      %v268 = vld [vmem:[%s161 + $0x318] sm:$0xff]
      %v269 = vld [vmem:[%s161 + $0x320] sm:$0xff]
      %v270 = vld [vmem:[%s161 + $0x328] sm:$0xff]
      %v271 = vld [vmem:[%s155] sm:$0xff]
      %v272 = vld [vmem:[%s155 + $0x8] sm:$0xff]
      %v273 = vld [vmem:[%s155 + $0x10] sm:$0xff]
      %v274 = vld [vmem:[%s155 + $0x18] sm:$0xff]
      %v275 = vld [vmem:[%s155 + $0x20] sm:$0xff]
      %v276 = vld [vmem:[%s155 + $0x28] sm:$0xff]
      %v277 = vld [vmem:[%s155 + $0x30] sm:$0xff]
      %v278 = vld [vmem:[%s155 + $0x38] sm:$0xff]
      %v279 = vld [vmem:[%s155 + $0x40] sm:$0xff]
      %v280 = vld [vmem:[%s155 + $0x48] sm:$0xff]
      %v281 = vld [vmem:[%s155 + $0x50] sm:$0xff]
      %v282 = vld [vmem:[%s155 + $0x58] sm:$0xff]
      %v283 = vld [vmem:[%s155 + $0x60] sm:$0xff]
      %v284 = vld [vmem:[%s155 + $0x68] sm:$0xff]
      %v285 = vld [vmem:[%s155 + $0x70] sm:$0xff]
      %v286 = vld [vmem:[%s155 + $0x78] sm:$0xff]
      %v287 = vld [vmem:[%s155 + $0x80] sm:$0xff]
      %v288 = vld [vmem:[%s155 + $0x88] sm:$0xff]
      %v289 = vld [vmem:[%s155 + $0x90] sm:$0xff]
      %v290 = vld [vmem:[%s155 + $0x98] sm:$0xff]
      %v291 = vld [vmem:[%s155 + $0xa0] sm:$0xff]
      %v292 = vld [vmem:[%s155 + $0xa8] sm:$0xff]
      %v293 = vld [vmem:[%s155 + $0xb0] sm:$0xff]
      %v294 = vld [vmem:[%s155 + $0xb8] sm:$0xff]
      %v295 = vld [vmem:[%s155 + $0xc0] sm:$0xff]
      %v296 = vld [vmem:[%s155 + $0xc8] sm:$0xff]
      %v297 = vld [vmem:[%s155 + $0xd0] sm:$0xff]
      %v298 = vld [vmem:[%s155 + $0xd8] sm:$0xff]
      %v299 = vld [vmem:[%s155 + $0xe0] sm:$0xff]
      %v300 = vld [vmem:[%s155 + $0xe8] sm:$0xff]
      %v301 = vld [vmem:[%s155 + $0xf0] sm:$0xff]
      %v302 = vld [vmem:[%s155 + $0xf8] sm:$0xff]
      %v303 = vld [vmem:[%s155 + $0x100] sm:$0xff]
      %v304 = vld [vmem:[%s155 + $0x108] sm:$0xff]
      %v305 = vld [vmem:[%s155 + $0x110] sm:$0xff]
      %v306 = vld [vmem:[%s155 + $0x118] sm:$0xff]
      %v307 = vld [vmem:[%s155 + $0x120] sm:$0xff]
      %v308 = vld [vmem:[%s155 + $0x128] sm:$0xff]
      %v309 = vld [vmem:[%s155 + $0x130] sm:$0xff]
      %v310 = vld [vmem:[%s155 + $0x138] sm:$0xff]
      %v311 = vld [vmem:[%s155 + $0x140] sm:$0xff]
      %v312 = vld [vmem:[%s155 + $0x148] sm:$0xff]
      %v313 = vld [vmem:[%s155 + $0x150] sm:$0xff]
      %v314 = vld [vmem:[%s155 + $0x158] sm:$0xff]
      %v315 = vld [vmem:[%s155 + $0x160] sm:$0xff]
      %v316 = vld [vmem:[%s155 + $0x168] sm:$0xff]
      %v317 = vld [vmem:[%s155 + $0x170] sm:$0xff]
      %v318 = vld [vmem:[%s155 + $0x178] sm:$0xff]
      %v319 = vld [vmem:[%s155 + $0x180] sm:$0xff]
      %v320 = vld [vmem:[%s155 + $0x188] sm:$0xff]
      %v321 = vld [vmem:[%s155 + $0x190] sm:$0xff]
      %v322 = vld [vmem:[%s155 + $0x198] sm:$0xff]
      %v323 = vld [vmem:[%s155 + $0x1a0] sm:$0xff]
      %v324 = vld [vmem:[%s155 + $0x1a8] sm:$0xff]
      %v325 = vld [vmem:[%s155 + $0x1b0] sm:$0xff]
      %v326 = vld [vmem:[%s155 + $0x1b8] sm:$0xff]
      %v327 = vld [vmem:[%s155 + $0x1c0] sm:$0xff]
      %v328 = vld [vmem:[%s155 + $0x1c8] sm:$0xff]
      %v329 = vld [vmem:[%s155 + $0x1d0] sm:$0xff]
      %v330 = vld [vmem:[%s155 + $0x1d8] sm:$0xff]
      %v331 = vld [vmem:[%s155 + $0x1e0] sm:$0xff]
      %v332 = vld [vmem:[%s155 + $0x1e8] sm:$0xff]
      %v333 = vld [vmem:[%s155 + $0x1f0] sm:$0xff]
      %v334 = vld [vmem:[%s155 + $0x1f8] sm:$0xff]
      %v335 = vld [vmem:[%s155 + $0x200] sm:$0xff]
      %v336 = vld [vmem:[%s155 + $0x208] sm:$0xff]
      %v337 = vld [vmem:[%s155 + $0x210] sm:$0xff]
      %v338 = vld [vmem:[%s155 + $0x218] sm:$0xff]
      %v339 = vld [vmem:[%s155 + $0x220] sm:$0xff]
      %v340 = vld [vmem:[%s155 + $0x228] sm:$0xff]
      %v341 = vld [vmem:[%s155 + $0x230] sm:$0xff]
      %v342 = vld [vmem:[%s155 + $0x238] sm:$0xff]
      %v343 = vld [vmem:[%s155 + $0x240] sm:$0xff]
      %v344 = vld [vmem:[%s155 + $0x248] sm:$0xff]
      %v345 = vld [vmem:[%s155 + $0x250] sm:$0xff]
      %v346 = vld [vmem:[%s155 + $0x258] sm:$0xff]
      %v347 = vld [vmem:[%s155 + $0x260] sm:$0xff]
      %v348 = vld [vmem:[%s155 + $0x268] sm:$0xff]
      %v349 = vld [vmem:[%s155 + $0x270] sm:$0xff]
      %v350 = vld [vmem:[%s155 + $0x278] sm:$0xff]
      %v351 = vld [vmem:[%s155 + $0x280] sm:$0xff]
      %v352 = vld [vmem:[%s155 + $0x288] sm:$0xff]
      %v353 = vld [vmem:[%s155 + $0x290] sm:$0xff]
      %v354 = vld [vmem:[%s155 + $0x298] sm:$0xff]
      %v355 = vld [vmem:[%s155 + $0x2a0] sm:$0xff]
      %v356 = vld [vmem:[%s155 + $0x2a8] sm:$0xff]
      %v357 = vld [vmem:[%s155 + $0x2b0] sm:$0xff]
      %v358 = vld [vmem:[%s155 + $0x2b8] sm:$0xff]
      %v359 = vld [vmem:[%s155 + $0x2c0] sm:$0xff]
      %v360 = vld [vmem:[%s155 + $0x2c8] sm:$0xff]
      %v361 = vld [vmem:[%s155 + $0x2d0] sm:$0xff]
      %v362 = vld [vmem:[%s155 + $0x2d8] sm:$0xff]
      %v363 = vld [vmem:[%s155 + $0x2e0] sm:$0xff]
      %v364 = vld [vmem:[%s155 + $0x2e8] sm:$0xff]
      %v365 = vld [vmem:[%s155 + $0x2f0] sm:$0xff]
      %v366 = vld [vmem:[%s155 + $0x2f8] sm:$0xff]
      %v367 = vld [vmem:[%s155 + $0x300] sm:$0xff]
      %v368 = vld [vmem:[%s155 + $0x308] sm:$0xff]
      %v369 = vld [vmem:[%s155 + $0x310] sm:$0xff]
      %v370 = vld [vmem:[%s155 + $0x318] sm:$0xff]
      %v371 = vld [vmem:[%s155 + $0x320] sm:$0xff]
      %v372 = vld [vmem:[%s155 + $0x328] sm:$0xff]
      %374 = vset.pattern.permute.xlu0 0
      %375 = vperm.xlu0 %374, %v271
      %v376 = vpop.permute.xlu0 %375
      %379 = vset.pattern.permute.xlu0 0
      %380 = vperm.xlu0 %379, %v272
      %v381 = vpop.permute.xlu0 %380
      %384 = vset.pattern.permute.xlu0 0
      %385 = vperm.xlu0 %384, %v273
      %v386 = vpop.permute.xlu0 %385
      %389 = vset.pattern.permute.xlu0 0
      %390 = vperm.xlu0 %389, %v274
      %v391 = vpop.permute.xlu0 %390
      %394 = vset.pattern.permute.xlu0 0
      %395 = vperm.xlu0 %394, %v275
      %v396 = vpop.permute.xlu0 %395
      %399 = vset.pattern.permute.xlu0 0
      %400 = vperm.xlu0 %399, %v276
      %v401 = vpop.permute.xlu0 %400
      %404 = vset.pattern.permute.xlu0 0
      %405 = vperm.xlu0 %404, %v277
      %v406 = vpop.permute.xlu0 %405
      %409 = vset.pattern.permute.xlu0 0
      %410 = vperm.xlu0 %409, %v278
      %v411 = vpop.permute.xlu0 %410
      %414 = vset.pattern.permute.xlu0 0
      %415 = vperm.xlu0 %414, %v279
      %v416 = vpop.permute.xlu0 %415
      %419 = vset.pattern.permute.xlu0 0
      %420 = vperm.xlu0 %419, %v280
      %v421 = vpop.permute.xlu0 %420
      %424 = vset.pattern.permute.xlu0 0
      %425 = vperm.xlu0 %424, %v281
      %v426 = vpop.permute.xlu0 %425
      %429 = vset.pattern.permute.xlu0 0
      %430 = vperm.xlu0 %429, %v282
      %v431 = vpop.permute.xlu0 %430
      %434 = vset.pattern.permute.xlu0 0
      %435 = vperm.xlu0 %434, %v283
      %v436 = vpop.permute.xlu0 %435
      %439 = vset.pattern.permute.xlu0 0
      %440 = vperm.xlu0 %439, %v284
      %v441 = vpop.permute.xlu0 %440
      %444 = vset.pattern.permute.xlu0 0
      %445 = vperm.xlu0 %444, %v285
      %v446 = vpop.permute.xlu0 %445
      %449 = vset.pattern.permute.xlu0 0
      %450 = vperm.xlu0 %449, %v286
      %v451 = vpop.permute.xlu0 %450
      %454 = vset.pattern.permute.xlu0 0
      %455 = vperm.xlu0 %454, %v287
      %v456 = vpop.permute.xlu0 %455
      %459 = vset.pattern.permute.xlu0 0
      %460 = vperm.xlu0 %459, %v288
      %v461 = vpop.permute.xlu0 %460
      %464 = vset.pattern.permute.xlu0 0
      %465 = vperm.xlu0 %464, %v289
      %v466 = vpop.permute.xlu0 %465
      %469 = vset.pattern.permute.xlu0 0
      %470 = vperm.xlu0 %469, %v290
      %v471 = vpop.permute.xlu0 %470
      %474 = vset.pattern.permute.xlu0 0
      %475 = vperm.xlu0 %474, %v291
      %v476 = vpop.permute.xlu0 %475
      %479 = vset.pattern.permute.xlu0 0
      %480 = vperm.xlu0 %479, %v292
      %v481 = vpop.permute.xlu0 %480
      %484 = vset.pattern.permute.xlu0 0
      %485 = vperm.xlu0 %484, %v293
      %v486 = vpop.permute.xlu0 %485
      %489 = vset.pattern.permute.xlu0 0
      %490 = vperm.xlu0 %489, %v294
      %v491 = vpop.permute.xlu0 %490
      %494 = vset.pattern.permute.xlu0 0
      %495 = vperm.xlu0 %494, %v295
      %v496 = vpop.permute.xlu0 %495
      %499 = vset.pattern.permute.xlu0 0
      %500 = vperm.xlu0 %499, %v296
      %v501 = vpop.permute.xlu0 %500
      %504 = vset.pattern.permute.xlu0 0
      %505 = vperm.xlu0 %504, %v297
      %v506 = vpop.permute.xlu0 %505
      %509 = vset.pattern.permute.xlu0 0
      %510 = vperm.xlu0 %509, %v298
      %v511 = vpop.permute.xlu0 %510
      %514 = vset.pattern.permute.xlu0 0
      %515 = vperm.xlu0 %514, %v299
      %v516 = vpop.permute.xlu0 %515
      %519 = vset.pattern.permute.xlu0 0
      %520 = vperm.xlu0 %519, %v300
      %v521 = vpop.permute.xlu0 %520
      %524 = vset.pattern.permute.xlu0 0
      %525 = vperm.xlu0 %524, %v301
      %v526 = vpop.permute.xlu0 %525
      %529 = vset.pattern.permute.xlu0 0
      %530 = vperm.xlu0 %529, %v302
      %v531 = vpop.permute.xlu0 %530
      %534 = vset.pattern.permute.xlu0 0
      %535 = vperm.xlu0 %534, %v303
      %v536 = vpop.permute.xlu0 %535
      %539 = vset.pattern.permute.xlu0 0
      %540 = vperm.xlu0 %539, %v304
      %v541 = vpop.permute.xlu0 %540
      %544 = vset.pattern.permute.xlu0 0
      %545 = vperm.xlu0 %544, %v305
      %v546 = vpop.permute.xlu0 %545
      %549 = vset.pattern.permute.xlu0 0
      %550 = vperm.xlu0 %549, %v306
      %v551 = vpop.permute.xlu0 %550
      %554 = vset.pattern.permute.xlu0 0
      %555 = vperm.xlu0 %554, %v307
      %v556 = vpop.permute.xlu0 %555
      %559 = vset.pattern.permute.xlu0 0
      %560 = vperm.xlu0 %559, %v308
      %v561 = vpop.permute.xlu0 %560
      %564 = vset.pattern.permute.xlu0 0
      %565 = vperm.xlu0 %564, %v309
      %v566 = vpop.permute.xlu0 %565
      %569 = vset.pattern.permute.xlu0 0
      %570 = vperm.xlu0 %569, %v310
      %v571 = vpop.permute.xlu0 %570
      %574 = vset.pattern.permute.xlu0 0
      %575 = vperm.xlu0 %574, %v311
      %v576 = vpop.permute.xlu0 %575
      %579 = vset.pattern.permute.xlu0 0
      %580 = vperm.xlu0 %579, %v312
      %v581 = vpop.permute.xlu0 %580
      %584 = vset.pattern.permute.xlu0 0
      %585 = vperm.xlu0 %584, %v313
      %v586 = vpop.permute.xlu0 %585
      %589 = vset.pattern.permute.xlu0 0
      %590 = vperm.xlu0 %589, %v314
      %v591 = vpop.permute.xlu0 %590
      %594 = vset.pattern.permute.xlu0 0
      %595 = vperm.xlu0 %594, %v315
      %v596 = vpop.permute.xlu0 %595
      %599 = vset.pattern.permute.xlu0 0
      %600 = vperm.xlu0 %599, %v316
      %v601 = vpop.permute.xlu0 %600
      %604 = vset.pattern.permute.xlu0 0
      %605 = vperm.xlu0 %604, %v317
      %v606 = vpop.permute.xlu0 %605
      %609 = vset.pattern.permute.xlu0 0
      %610 = vperm.xlu0 %609, %v318
      %v611 = vpop.permute.xlu0 %610
      %614 = vset.pattern.permute.xlu0 0
      %615 = vperm.xlu0 %614, %v319
      %v616 = vpop.permute.xlu0 %615
      %619 = vset.pattern.permute.xlu0 0
      %620 = vperm.xlu0 %619, %v320
      %v621 = vpop.permute.xlu0 %620
      %624 = vset.pattern.permute.xlu0 0
      %625 = vperm.xlu0 %624, %v321
      %v626 = vpop.permute.xlu0 %625
      %629 = vset.pattern.permute.xlu0 0
      %630 = vperm.xlu0 %629, %v322
      %v631 = vpop.permute.xlu0 %630
      %634 = vset.pattern.permute.xlu0 0
      %635 = vperm.xlu0 %634, %v323
      %v636 = vpop.permute.xlu0 %635
      %639 = vset.pattern.permute.xlu0 0
      %640 = vperm.xlu0 %639, %v324
      %v641 = vpop.permute.xlu0 %640
      %644 = vset.pattern.permute.xlu0 0
      %645 = vperm.xlu0 %644, %v325
      %v646 = vpop.permute.xlu0 %645
      %649 = vset.pattern.permute.xlu0 0
      %650 = vperm.xlu0 %649, %v326
      %v651 = vpop.permute.xlu0 %650
      %654 = vset.pattern.permute.xlu0 0
      %655 = vperm.xlu0 %654, %v327
      %v656 = vpop.permute.xlu0 %655
      %659 = vset.pattern.permute.xlu0 0
      %660 = vperm.xlu0 %659, %v328
      %v661 = vpop.permute.xlu0 %660
      %664 = vset.pattern.permute.xlu0 0
      %665 = vperm.xlu0 %664, %v329
      %v666 = vpop.permute.xlu0 %665
      %669 = vset.pattern.permute.xlu0 0
      %670 = vperm.xlu0 %669, %v330
      %v671 = vpop.permute.xlu0 %670
      %674 = vset.pattern.permute.xlu0 0
      %675 = vperm.xlu0 %674, %v331
      %v676 = vpop.permute.xlu0 %675
      %679 = vset.pattern.permute.xlu0 0
      %680 = vperm.xlu0 %679, %v332
      %v681 = vpop.permute.xlu0 %680
      %684 = vset.pattern.permute.xlu0 0
      %685 = vperm.xlu0 %684, %v333
      %v686 = vpop.permute.xlu0 %685
      %689 = vset.pattern.permute.xlu0 0
      %690 = vperm.xlu0 %689, %v334
      %v691 = vpop.permute.xlu0 %690
      %694 = vset.pattern.permute.xlu0 0
      %695 = vperm.xlu0 %694, %v335
      %v696 = vpop.permute.xlu0 %695
      %699 = vset.pattern.permute.xlu0 0
      %700 = vperm.xlu0 %699, %v336
      %v701 = vpop.permute.xlu0 %700
      %704 = vset.pattern.permute.xlu0 0
      %705 = vperm.xlu0 %704, %v337
      %v706 = vpop.permute.xlu0 %705
      %709 = vset.pattern.permute.xlu0 0
      %710 = vperm.xlu0 %709, %v338
      %v711 = vpop.permute.xlu0 %710
      %714 = vset.pattern.permute.xlu0 0
      %715 = vperm.xlu0 %714, %v339
      %v716 = vpop.permute.xlu0 %715
      %719 = vset.pattern.permute.xlu0 0
      %720 = vperm.xlu0 %719, %v340
      %v721 = vpop.permute.xlu0 %720
      %724 = vset.pattern.permute.xlu0 0
      %725 = vperm.xlu0 %724, %v341
      %v726 = vpop.permute.xlu0 %725
      %729 = vset.pattern.permute.xlu0 0
      %730 = vperm.xlu0 %729, %v342
      %v731 = vpop.permute.xlu0 %730
      %734 = vset.pattern.permute.xlu0 0
      %735 = vperm.xlu0 %734, %v343
      %v736 = vpop.permute.xlu0 %735
      %739 = vset.pattern.permute.xlu0 0
      %740 = vperm.xlu0 %739, %v344
      %v741 = vpop.permute.xlu0 %740
      %744 = vset.pattern.permute.xlu0 0
      %745 = vperm.xlu0 %744, %v345
      %v746 = vpop.permute.xlu0 %745
      %749 = vset.pattern.permute.xlu0 0
      %750 = vperm.xlu0 %749, %v346
      %v751 = vpop.permute.xlu0 %750
      %754 = vset.pattern.permute.xlu0 0
      %755 = vperm.xlu0 %754, %v347
      %v756 = vpop.permute.xlu0 %755
      %759 = vset.pattern.permute.xlu0 0
      %760 = vperm.xlu0 %759, %v348
      %v761 = vpop.permute.xlu0 %760
      %764 = vset.pattern.permute.xlu0 0
      %765 = vperm.xlu0 %764, %v349
      %v766 = vpop.permute.xlu0 %765
      %769 = vset.pattern.permute.xlu0 0
      %770 = vperm.xlu0 %769, %v350
      %v771 = vpop.permute.xlu0 %770
      %774 = vset.pattern.permute.xlu0 0
      %775 = vperm.xlu0 %774, %v351
      %v776 = vpop.permute.xlu0 %775
      %779 = vset.pattern.permute.xlu0 0
      %780 = vperm.xlu0 %779, %v352
      %v781 = vpop.permute.xlu0 %780
      %784 = vset.pattern.permute.xlu0 0
      %785 = vperm.xlu0 %784, %v353
      %v786 = vpop.permute.xlu0 %785
      %789 = vset.pattern.permute.xlu0 0
      %790 = vperm.xlu0 %789, %v354
      %v791 = vpop.permute.xlu0 %790
      %794 = vset.pattern.permute.xlu0 0
      %795 = vperm.xlu0 %794, %v355
      %v796 = vpop.permute.xlu0 %795
      %799 = vset.pattern.permute.xlu0 0
      %800 = vperm.xlu0 %799, %v356
      %v801 = vpop.permute.xlu0 %800
      %804 = vset.pattern.permute.xlu0 0
      %805 = vperm.xlu0 %804, %v357
      %v806 = vpop.permute.xlu0 %805
      %809 = vset.pattern.permute.xlu0 0
      %810 = vperm.xlu0 %809, %v358
      %v811 = vpop.permute.xlu0 %810
      %814 = vset.pattern.permute.xlu0 0
      %815 = vperm.xlu0 %814, %v359
      %v816 = vpop.permute.xlu0 %815
      %819 = vset.pattern.permute.xlu0 0
      %820 = vperm.xlu0 %819, %v360
      %v821 = vpop.permute.xlu0 %820
      %824 = vset.pattern.permute.xlu0 0
      %825 = vperm.xlu0 %824, %v361
      %v826 = vpop.permute.xlu0 %825
      %829 = vset.pattern.permute.xlu0 0
      %830 = vperm.xlu0 %829, %v362
      %v831 = vpop.permute.xlu0 %830
      %834 = vset.pattern.permute.xlu0 0
      %835 = vperm.xlu0 %834, %v363
      %v836 = vpop.permute.xlu0 %835
      %839 = vset.pattern.permute.xlu0 0
      %840 = vperm.xlu0 %839, %v364
      %v841 = vpop.permute.xlu0 %840
      %844 = vset.pattern.permute.xlu0 0
      %845 = vperm.xlu0 %844, %v365
      %v846 = vpop.permute.xlu0 %845
      %849 = vset.pattern.permute.xlu0 0
      %850 = vperm.xlu0 %849, %v366
      %v851 = vpop.permute.xlu0 %850
      %854 = vset.pattern.permute.xlu0 0
      %855 = vperm.xlu0 %854, %v367
      %v856 = vpop.permute.xlu0 %855
      %859 = vset.pattern.permute.xlu0 0
      %860 = vperm.xlu0 %859, %v368
      %v861 = vpop.permute.xlu0 %860
      %864 = vset.pattern.permute.xlu0 0
      %865 = vperm.xlu0 %864, %v369
      %v866 = vpop.permute.xlu0 %865
      %869 = vset.pattern.permute.xlu0 0
      %870 = vperm.xlu0 %869, %v370
      %v871 = vpop.permute.xlu0 %870
      %874 = vset.pattern.permute.xlu0 0
      %875 = vperm.xlu0 %874, %v371
      %v876 = vpop.permute.xlu0 %875
      %879 = vset.pattern.permute.xlu0 0
      %880 = vperm.xlu0 %879, %v372
      %v881 = vpop.permute.xlu0 %880
      %v883 = vmul.f32 %v169, %v376
      %v884 = vmul.f32 %v170, %v381
      %v885 = vmul.f32 %v171, %v386
      %v886 = vmul.f32 %v172, %v391
      %v887 = vmul.f32 %v173, %v396
      %v888 = vmul.f32 %v174, %v401
      %v889 = vmul.f32 %v175, %v406
      %v890 = vmul.f32 %v176, %v411
      %v891 = vmul.f32 %v177, %v416
      %v892 = vmul.f32 %v178, %v421
      %v893 = vmul.f32 %v179, %v426
      %v894 = vmul.f32 %v180, %v431
      %v895 = vmul.f32 %v181, %v436
      %v896 = vmul.f32 %v182, %v441
      %v897 = vmul.f32 %v183, %v446
      %v898 = vmul.f32 %v184, %v451
      %v899 = vmul.f32 %v185, %v456
      %v900 = vmul.f32 %v186, %v461
      %v901 = vmul.f32 %v187, %v466
      %v902 = vmul.f32 %v188, %v471
      %v903 = vmul.f32 %v189, %v476
      %v904 = vmul.f32 %v190, %v481
      %v905 = vmul.f32 %v191, %v486
      %v906 = vmul.f32 %v192, %v491
      %v907 = vmul.f32 %v193, %v496
      %v908 = vmul.f32 %v194, %v501
      %v909 = vmul.f32 %v195, %v506
      %v910 = vmul.f32 %v196, %v511
      %v911 = vmul.f32 %v197, %v516
      %v912 = vmul.f32 %v198, %v521
      %v913 = vmul.f32 %v199, %v526
      %v914 = vmul.f32 %v200, %v531
      %v915 = vmul.f32 %v201, %v536
      %v916 = vmul.f32 %v202, %v541
      %v917 = vmul.f32 %v203, %v546
      %v918 = vmul.f32 %v204, %v551
      %v919 = vmul.f32 %v205, %v556
      %v920 = vmul.f32 %v206, %v561
      %v921 = vmul.f32 %v207, %v566
      %v922 = vmul.f32 %v208, %v571
      %v923 = vmul.f32 %v209, %v576
      %v924 = vmul.f32 %v210, %v581
      %v925 = vmul.f32 %v211, %v586
      %v926 = vmul.f32 %v212, %v591
      %v927 = vmul.f32 %v213, %v596
      %v928 = vmul.f32 %v214, %v601
      %v929 = vmul.f32 %v215, %v606
      %v930 = vmul.f32 %v216, %v611
      %v931 = vmul.f32 %v217, %v616
      %v932 = vmul.f32 %v218, %v621
      %v933 = vmul.f32 %v219, %v626
      %v934 = vmul.f32 %v220, %v631
      %v935 = vmul.f32 %v221, %v636
      %v936 = vmul.f32 %v222, %v641
      %v937 = vmul.f32 %v223, %v646
      %v938 = vmul.f32 %v224, %v651
      %v939 = vmul.f32 %v225, %v656
      %v940 = vmul.f32 %v226, %v661
      %v941 = vmul.f32 %v227, %v666
      %v942 = vmul.f32 %v228, %v671
      %v943 = vmul.f32 %v229, %v676
      %v944 = vmul.f32 %v230, %v681
      %v945 = vmul.f32 %v231, %v686
      %v946 = vmul.f32 %v232, %v691
      %v947 = vmul.f32 %v233, %v696
      %v948 = vmul.f32 %v234, %v701
      %v949 = vmul.f32 %v235, %v706
      %v950 = vmul.f32 %v236, %v711
      %v951 = vmul.f32 %v237, %v716
      %v952 = vmul.f32 %v238, %v721
      %v953 = vmul.f32 %v239, %v726
      %v954 = vmul.f32 %v240, %v731
      %v955 = vmul.f32 %v241, %v736
      %v956 = vmul.f32 %v242, %v741
      %v957 = vmul.f32 %v243, %v746
      %v958 = vmul.f32 %v244, %v751
      %v959 = vmul.f32 %v245, %v756
      %v960 = vmul.f32 %v246, %v761
      %v961 = vmul.f32 %v247, %v766
      %v962 = vmul.f32 %v248, %v771
      %v963 = vmul.f32 %v249, %v776
      %v964 = vmul.f32 %v250, %v781
      %v965 = vmul.f32 %v251, %v786
      %v966 = vmul.f32 %v252, %v791
      %v967 = vmul.f32 %v253, %v796
      %v968 = vmul.f32 %v254, %v801
      %v969 = vmul.f32 %v255, %v806
      %v970 = vmul.f32 %v256, %v811
      %v971 = vmul.f32 %v257, %v816
      %v972 = vmul.f32 %v258, %v821
      %v973 = vmul.f32 %v259, %v826
      %v974 = vmul.f32 %v260, %v831
      %v975 = vmul.f32 %v261, %v836
      %v976 = vmul.f32 %v262, %v841
      %v977 = vmul.f32 %v263, %v846
      %v978 = vmul.f32 %v264, %v851
      %v979 = vmul.f32 %v265, %v856
      %v980 = vmul.f32 %v266, %v861
      %v981 = vmul.f32 %v267, %v866
      %v982 = vmul.f32 %v268, %v871
      %v983 = vmul.f32 %v269, %v876
      %v984 = vmul.f32 %v270, %v881
      %vm985 = vcmask 400384
      %986 = vst.msk [vmem:[%s167] sm:$0xff] %vm985, %v883
      %987 = vst.msk [vmem:[%s167 + $0x8] sm:$0xff] %vm985, %v884
      %988 = vst.msk [vmem:[%s167 + $0x10] sm:$0xff] %vm985, %v885
      %989 = vst.msk [vmem:[%s167 + $0x18] sm:$0xff] %vm985, %v886
      %990 = vst.msk [vmem:[%s167 + $0x20] sm:$0xff] %vm985, %v887
      %991 = vst.msk [vmem:[%s167 + $0x28] sm:$0xff] %vm985, %v888
      %992 = vst.msk [vmem:[%s167 + $0x30] sm:$0xff] %vm985, %v889
      %993 = vst.msk [vmem:[%s167 + $0x38] sm:$0xff] %vm985, %v890
      %994 = vst.msk [vmem:[%s167 + $0x40] sm:$0xff] %vm985, %v891
      %995 = vst.msk [vmem:[%s167 + $0x48] sm:$0xff] %vm985, %v892
      %996 = vst.msk [vmem:[%s167 + $0x50] sm:$0xff] %vm985, %v893
      %997 = vst.msk [vmem:[%s167 + $0x58] sm:$0xff] %vm985, %v894
      %998 = vst.msk [vmem:[%s167 + $0x60] sm:$0xff] %vm985, %v895
      %999 = vst.msk [vmem:[%s167 + $0x68] sm:$0xff] %vm985, %v896
      %1000 = vst.msk [vmem:[%s167 + $0x70] sm:$0xff] %vm985, %v897
      %1001 = vst.msk [vmem:[%s167 + $0x78] sm:$0xff] %vm985, %v898
      %1002 = vst.msk [vmem:[%s167 + $0x80] sm:$0xff] %vm985, %v899
      %1003 = vst.msk [vmem:[%s167 + $0x88] sm:$0xff] %vm985, %v900
      %1004 = vst.msk [vmem:[%s167 + $0x90] sm:$0xff] %vm985, %v901
      %1005 = vst.msk [vmem:[%s167 + $0x98] sm:$0xff] %vm985, %v902
      %1006 = vst.msk [vmem:[%s167 + $0xa0] sm:$0xff] %vm985, %v903
      %1007 = vst.msk [vmem:[%s167 + $0xa8] sm:$0xff] %vm985, %v904
      %1008 = vst.msk [vmem:[%s167 + $0xb0] sm:$0xff] %vm985, %v905
      %1009 = vst.msk [vmem:[%s167 + $0xb8] sm:$0xff] %vm985, %v906
      %1010 = vst.msk [vmem:[%s167 + $0xc0] sm:$0xff] %vm985, %v907
      %1011 = vst.msk [vmem:[%s167 + $0xc8] sm:$0xff] %vm985, %v908
      %1012 = vst.msk [vmem:[%s167 + $0xd0] sm:$0xff] %vm985, %v909
      %1013 = vst.msk [vmem:[%s167 + $0xd8] sm:$0xff] %vm985, %v910
      %1014 = vst.msk [vmem:[%s167 + $0xe0] sm:$0xff] %vm985, %v911
      %1015 = vst.msk [vmem:[%s167 + $0xe8] sm:$0xff] %vm985, %v912
      %1016 = vst.msk [vmem:[%s167 + $0xf0] sm:$0xff] %vm985, %v913
      %1017 = vst.msk [vmem:[%s167 + $0xf8] sm:$0xff] %vm985, %v914
      %1018 = vst.msk [vmem:[%s167 + $0x100] sm:$0xff] %vm985, %v915
      %1019 = vst.msk [vmem:[%s167 + $0x108] sm:$0xff] %vm985, %v916
      %1020 = vst.msk [vmem:[%s167 + $0x110] sm:$0xff] %vm985, %v917
      %1021 = vst.msk [vmem:[%s167 + $0x118] sm:$0xff] %vm985, %v918
      %1022 = vst.msk [vmem:[%s167 + $0x120] sm:$0xff] %vm985, %v919
      %1023 = vst.msk [vmem:[%s167 + $0x128] sm:$0xff] %vm985, %v920
      %1024 = vst.msk [vmem:[%s167 + $0x130] sm:$0xff] %vm985, %v921
      %1025 = vst.msk [vmem:[%s167 + $0x138] sm:$0xff] %vm985, %v922
      %1026 = vst.msk [vmem:[%s167 + $0x140] sm:$0xff] %vm985, %v923
      %1027 = vst.msk [vmem:[%s167 + $0x148] sm:$0xff] %vm985, %v924
      %1028 = vst.msk [vmem:[%s167 + $0x150] sm:$0xff] %vm985, %v925
      %1029 = vst.msk [vmem:[%s167 + $0x158] sm:$0xff] %vm985, %v926
      %1030 = vst.msk [vmem:[%s167 + $0x160] sm:$0xff] %vm985, %v927
      %1031 = vst.msk [vmem:[%s167 + $0x168] sm:$0xff] %vm985, %v928
      %1032 = vst.msk [vmem:[%s167 + $0x170] sm:$0xff] %vm985, %v929
      %1033 = vst.msk [vmem:[%s167 + $0x178] sm:$0xff] %vm985, %v930
      %1034 = vst.msk [vmem:[%s167 + $0x180] sm:$0xff] %vm985, %v931
      %1035 = vst.msk [vmem:[%s167 + $0x188] sm:$0xff] %vm985, %v932
      %1036 = vst.msk [vmem:[%s167 + $0x190] sm:$0xff] %vm985, %v933
      %1037 = vst.msk [vmem:[%s167 + $0x198] sm:$0xff] %vm985, %v934
      %1038 = vst.msk [vmem:[%s167 + $0x1a0] sm:$0xff] %vm985, %v935
      %1039 = vst.msk [vmem:[%s167 + $0x1a8] sm:$0xff] %vm985, %v936
      %1040 = vst.msk [vmem:[%s167 + $0x1b0] sm:$0xff] %vm985, %v937
      %1041 = vst.msk [vmem:[%s167 + $0x1b8] sm:$0xff] %vm985, %v938
      %1042 = vst.msk [vmem:[%s167 + $0x1c0] sm:$0xff] %vm985, %v939
      %1043 = vst.msk [vmem:[%s167 + $0x1c8] sm:$0xff] %vm985, %v940
      %1044 = vst.msk [vmem:[%s167 + $0x1d0] sm:$0xff] %vm985, %v941
      %1045 = vst.msk [vmem:[%s167 + $0x1d8] sm:$0xff] %vm985, %v942
      %1046 = vst.msk [vmem:[%s167 + $0x1e0] sm:$0xff] %vm985, %v943
      %1047 = vst.msk [vmem:[%s167 + $0x1e8] sm:$0xff] %vm985, %v944
      %1048 = vst.msk [vmem:[%s167 + $0x1f0] sm:$0xff] %vm985, %v945
      %1049 = vst.msk [vmem:[%s167 + $0x1f8] sm:$0xff] %vm985, %v946
      %1050 = vst.msk [vmem:[%s167 + $0x200] sm:$0xff] %vm985, %v947
      %1051 = vst.msk [vmem:[%s167 + $0x208] sm:$0xff] %vm985, %v948
      %1052 = vst.msk [vmem:[%s167 + $0x210] sm:$0xff] %vm985, %v949
      %1053 = vst.msk [vmem:[%s167 + $0x218] sm:$0xff] %vm985, %v950
      %1054 = vst.msk [vmem:[%s167 + $0x220] sm:$0xff] %vm985, %v951
      %1055 = vst.msk [vmem:[%s167 + $0x228] sm:$0xff] %vm985, %v952
      %1056 = vst.msk [vmem:[%s167 + $0x230] sm:$0xff] %vm985, %v953
      %1057 = vst.msk [vmem:[%s167 + $0x238] sm:$0xff] %vm985, %v954
      %1058 = vst.msk [vmem:[%s167 + $0x240] sm:$0xff] %vm985, %v955
      %1059 = vst.msk [vmem:[%s167 + $0x248] sm:$0xff] %vm985, %v956
      %1060 = vst.msk [vmem:[%s167 + $0x250] sm:$0xff] %vm985, %v957
      %1061 = vst.msk [vmem:[%s167 + $0x258] sm:$0xff] %vm985, %v958
      %1062 = vst.msk [vmem:[%s167 + $0x260] sm:$0xff] %vm985, %v959
      %1063 = vst.msk [vmem:[%s167 + $0x268] sm:$0xff] %vm985, %v960
      %1064 = vst.msk [vmem:[%s167 + $0x270] sm:$0xff] %vm985, %v961
      %1065 = vst.msk [vmem:[%s167 + $0x278] sm:$0xff] %vm985, %v962
      %1066 = vst.msk [vmem:[%s167 + $0x280] sm:$0xff] %vm985, %v963
      %1067 = vst.msk [vmem:[%s167 + $0x288] sm:$0xff] %vm985, %v964
      %1068 = vst.msk [vmem:[%s167 + $0x290] sm:$0xff] %vm985, %v965
      %1069 = vst.msk [vmem:[%s167 + $0x298] sm:$0xff] %vm985, %v966
      %1070 = vst.msk [vmem:[%s167 + $0x2a0] sm:$0xff] %vm985, %v967
      %1071 = vst.msk [vmem:[%s167 + $0x2a8] sm:$0xff] %vm985, %v968
      %1072 = vst.msk [vmem:[%s167 + $0x2b0] sm:$0xff] %vm985, %v969
      %1073 = vst.msk [vmem:[%s167 + $0x2b8] sm:$0xff] %vm985, %v970
      %1074 = vst.msk [vmem:[%s167 + $0x2c0] sm:$0xff] %vm985, %v971
      %1075 = vst.msk [vmem:[%s167 + $0x2c8] sm:$0xff] %vm985, %v972
      %1076 = vst.msk [vmem:[%s167 + $0x2d0] sm:$0xff] %vm985, %v973
      %1077 = vst.msk [vmem:[%s167 + $0x2d8] sm:$0xff] %vm985, %v974
      %1078 = vst.msk [vmem:[%s167 + $0x2e0] sm:$0xff] %vm985, %v975
      %1079 = vst.msk [vmem:[%s167 + $0x2e8] sm:$0xff] %vm985, %v976
      %1080 = vst.msk [vmem:[%s167 + $0x2f0] sm:$0xff] %vm985, %v977
      %1081 = vst.msk [vmem:[%s167 + $0x2f8] sm:$0xff] %vm985, %v978
      %1082 = vst.msk [vmem:[%s167 + $0x300] sm:$0xff] %vm985, %v979
      %1083 = vst.msk [vmem:[%s167 + $0x308] sm:$0xff] %vm985, %v980
      %1084 = vst.msk [vmem:[%s167 + $0x310] sm:$0xff] %vm985, %v981
      %1085 = vst.msk [vmem:[%s167 + $0x318] sm:$0xff] %vm985, %v982
      %1086 = vst.msk [vmem:[%s167 + $0x320] sm:$0xff] %vm985, %v983
      %1087 = vst.msk [vmem:[%s167 + $0x328] sm:$0xff] %vm985, %v984
      %s1088 = smul.u32 102, %s13
      %p1089 = scmp.lt.s32.totalorder %s1088, 203
      %s1090 = scalar_select %p1089, %s1088, 203
      %s1091 = smul.addr %s1090, 8
      %s1092 = scalar_lea.vmem %s2, %s1091
      // Predicated region
      $region29: #{tpu_custom_call.1} parent=27 // pred_check
        %p1093 = pneg %p83
      $region30: #{tpu_custom_call.1} parent=27 // pred_check_branch
        %1095 = sbr.rel (%p1093) target = $region32
      $region31: #{tpu_custom_call.1} parent=27 // pred_region
        %s1096 = smul.u32 102, %s13
      $region32: #{tpu_custom_call.1} parent=27 // pred_fallthru
        _
    $region28: #{tpu_custom_call.1} parent=5 // pred_fallthru
      _
    %p1097 = scmp.le.s32.totalorder 2, %s8
    // Predicated region
    $region33: #{tpu_custom_call.1} parent=5 // pred_check
      %p1098 = pneg %p1097
    $region34: #{tpu_custom_call.1} parent=5 // pred_check_branch
      %1100 = sbr.rel (%p1098) target = $region36
    $region35: #{tpu_custom_call.1} parent=5 // pred_region
      %s1101 = ssub.s32 %s8, 2
      // Predicated region
      $region37: #{tpu_custom_call.1} parent=35 // pred_check
        %p1102 = pneg %p89
      $region38: #{tpu_custom_call.1} parent=35 // pred_check_branch
        %1104 = sbr.rel (%p1102) target = $region40
      $region39: #{tpu_custom_call.1} parent=35 // pred_region
        %s1105 = smul.u32 102, %s14
        %p1106 = scmp.lt.s32.totalorder %s1105, 203
        %s1107 = scalar_select %p1106, %s1105, 203
        %s1108 = smul.addr %s1107, 8
        %s1109 = scalar_lea.vmem %s2, %s1108
      $region40: #{tpu_custom_call.1} parent=35 // pred_fallthru
        _
    $region36: #{tpu_custom_call.1} parent=5 // pred_fallthru
      _
  $region6: #{tpu_custom_call.1} parent=0 // loop_footer
    %s12 = sadd.s32 1, %s8
  $region7: #{tpu_custom_call.1} parent=0 // loop_footer_branch
    %7 = sbr.rel target = $region3
  $region8: #{tpu_custom_call.1} parent=0 // loop_exit
    _

</llo_original>
